<compile_context>
chip_gen: v7x
topology: tpu7x:2x2x1
jax: 0.10.0
libtpu: 0.0.40
codegen_flags: <defaults>
</compile_context>

<pallas_src>
import jax
import jax.numpy as jnp
from jax import lax
from jax.experimental import pallas as pl
from jax.experimental.pallas import tpu as pltpu


def _lstm_seq_kernel(gx_ref, whh_ref, h0_ref, c0_ref, out_ref, hN_ref, cN_ref):
    """Run the full LSTM recurrence over time inside one kernel invocation.

    gx_ref : (T, B, 4H)  precomputed x @ W_ih^T + (b_ih + b_hh), f32
    whh_ref: (H, 4H)     W_hh^T
    h0/c0  : (B, H)      initial state
    out    : (T, B, H)   stacked hidden states
    hN/cN  : (B, H)      final state
    """
    T = gx_ref.shape[0]
    H = h0_ref.shape[-1]

    # Load the recurrent weight once; it stays in vregs across the unrolled loop.
    whh = whh_ref[...].astype(jnp.float32)                    # (H, 4H)

    def step(t, carry):
        h, c = carry
        # gates = gates_x[t] + h @ W_hh^T      (PyTorch LSTMCell gate order i,f,g,o)
        gates = gx_ref[t] + jnp.dot(h, whh, preferred_element_type=jnp.float32)

        # One sigmoid over the whole (B, 4H) gate tensor, slice i/f/o from it;
        # tanh only on the g slice.
        s = jax.nn.sigmoid(gates)
        i = s[:, 0 * H:1 * H]
        f = s[:, 1 * H:2 * H]
        o = s[:, 3 * H:4 * H]
        g = jnp.tanh(gates[:, 2 * H:3 * H])

        c = f * c + i * g
        h = o * jnp.tanh(c)

        out_ref[t] = h.astype(out_ref.dtype)
        return (h, c)

    h0 = h0_ref[...].astype(jnp.float32)
    c0 = c0_ref[...].astype(jnp.float32)
    hT, cT = lax.fori_loop(0, T, step, (h0, c0), unroll=True)

    # Final state written exactly once, after the loop (no per-step vst traffic).
    hN_ref[...] = hT.astype(hN_ref.dtype)
    cN_ref[...] = cT.astype(cN_ref.dtype)


def my_lstm_pallas(xs, h0, c0, w_ih, w_hh, b_ih, b_hh):
    """xs: (T, B, I); h0, c0: (B, H); w_ih: (4H, I); w_hh: (4H, H); b_*: (4H,)."""
    T, B, I = xs.shape
    H = h0.shape[-1]

    # Hoisted input projection: one big parallel matmul (no serial dependency).
    bias = (b_ih + b_hh).astype(jnp.float32)                  # (4H,)
    gates_x = (
        jnp.dot(xs.reshape(T * B, I).astype(jnp.float32), jnp.transpose(w_ih),
                preferred_element_type=jnp.float32)
        + bias
    ).reshape(T, B, 4 * H)                                    # (T, B, 4H)

    whh_t = jnp.transpose(w_hh)                               # (H, 4H)

    grid_spec = pltpu.PrefetchScalarGridSpec(
        num_scalar_prefetch=0,
        grid=(1,),                                            # single invocation
        in_specs=[
            pl.BlockSpec((T, B, 4 * H), lambda i: (0, 0, 0)),  # gates_x
            pl.BlockSpec((H, 4 * H), lambda i: (0, 0)),        # W_hh^T
            pl.BlockSpec((B, H), lambda i: (0, 0)),            # h0
            pl.BlockSpec((B, H), lambda i: (0, 0)),            # c0
        ],
        out_specs=[
            pl.BlockSpec((T, B, H), lambda i: (0, 0, 0)),      # stacked outputs
            pl.BlockSpec((B, H), lambda i: (0, 0)),            # h_T
            pl.BlockSpec((B, H), lambda i: (0, 0)),            # c_T
        ],
    )

    out, hN, cN = pl.pallas_call(
        _lstm_seq_kernel,
        out_shape=(
            jax.ShapeDtypeStruct((T, B, H), xs.dtype),
            jax.ShapeDtypeStruct((B, H), xs.dtype),
            jax.ShapeDtypeStruct((B, H), xs.dtype),
        ),
        grid_spec=grid_spec,
        compiler_params=pltpu.CompilerParams(
            dimension_semantics=("arbitrary",),               # time is serial anyway
        ),
    )(gates_x, whh_t, h0, c0)
    return out, (hN, cN)


def _reference(xs, h0, c0, w_ih, w_hh, b_ih, b_hh):
    """Pure-JAX replica of PyTorch nn.LSTMCell unrolled over time."""
    H = h0.shape[-1]

    def step(carry, x):
        h, c = carry
        gates = x @ w_ih.T + b_ih + h @ w_hh.T + b_hh
        i = jax.nn.sigmoid(gates[:, 0 * H:1 * H])
        f = jax.nn.sigmoid(gates[:, 1 * H:2 * H])
        g = jnp.tanh(gates[:, 2 * H:3 * H])
        o = jax.nn.sigmoid(gates[:, 3 * H:4 * H])
        c = f * c + i * g
        h = o * jnp.tanh(c)
        return (h, c), h

    (hN, cN), outs = jax.lax.scan(step, (h0, c0), xs)
    return outs, (hN, cN)


if __name__ == "__main__":
    # Small shapes consistent with the module's forward.
    T, B, I, H = 8, 2, 16, 32

    key = jax.random.PRNGKey(0)
    k_x, k_h, k_c, k_wi, k_wh, k_bi, k_bh = jax.random.split(key, 7)

    xs = jax.random.normal(k_x, (T, B, I), dtype=jnp.float32)
    # state comes in as (1, B, H) and is .squeeze()'d in forward
    h0 = jax.random.normal(k_h, (1, B, H), dtype=jnp.float32).squeeze()
    c0 = jax.random.normal(k_c, (1, B, H), dtype=jnp.float32).squeeze()

    # PyTorch LSTMCell init: U(-1/sqrt(H), 1/sqrt(H)) for all params (deterministic here).
    bound = 1.0 / jnp.sqrt(jnp.float32(H))
    w_ih = jax.random.uniform(k_wi, (4 * H, I), jnp.float32, -bound, bound)
    w_hh = jax.random.uniform(k_wh, (4 * H, H), jnp.float32, -bound, bound)
    b_ih = jax.random.uniform(k_bi, (4 * H,), jnp.float32, -bound, bound)
    b_hh = jax.random.uniform(k_bh, (4 * H,), jnp.float32, -bound, bound)

    out, (hN, cN) = my_lstm_pallas(xs, h0, c0, w_ih, w_hh, b_ih, b_hh)
    out = jax.block_until_ready(out)
    hN = jax.block_until_ready(hN)
    cN = jax.block_until_ready(cN)

    out_ref, (hN_ref, cN_ref) = _reference(xs, h0, c0, w_ih, w_hh, b_ih, b_hh)
    assert jnp.allclose(out, out_ref, atol=1e-5, rtol=1e-5)
    assert jnp.allclose(hN, hN_ref, atol=1e-5, rtol=1e-5)
    assert jnp.allclose(cN, cN_ref, atol=1e-5, rtol=1e-5)

    print("KERNEL_OK")
</pallas_src>

<mosaic_0001>
module attributes {stable_mosaic.version = 11 : i64} {
  func.func @_lstm_seq_kernel(%arg0: i32, %arg1: memref<8x2x128xf32, #tpu.memory_space<vmem>>, %arg2: memref<32x128xf32, #tpu.memory_space<vmem>>, %arg3: memref<2x32xf32, #tpu.memory_space<vmem>>, %arg4: memref<2x32xf32, #tpu.memory_space<vmem>>, %arg5: memref<8x2x32xf32, #tpu.memory_space<vmem>>, %arg6: memref<2x32xf32, #tpu.memory_space<vmem>>, %arg7: memref<2x32xf32, #tpu.memory_space<vmem>>) attributes {dimension_semantics = [#tpu.dimension_semantics<arbitrary>], iteration_bounds = array<i64: 1>, scalar_prefetch = 0 : i64, scratch_operands = 0 : i64, tpu.core_type = #tpu.core_type<tc>, window_params = [{pipeline_mode = #tpu.pipeline_mode<synchronous>, transform_indices = @transform_0, window_bounds = array<i64: 8, 2, 128>}, {pipeline_mode = #tpu.pipeline_mode<synchronous>, transform_indices = @transform_1, window_bounds = array<i64: 32, 128>}, {pipeline_mode = #tpu.pipeline_mode<synchronous>, transform_indices = @transform_2, window_bounds = array<i64: 2, 32>}, {pipeline_mode = #tpu.pipeline_mode<synchronous>, transform_indices = @transform_3, window_bounds = array<i64: 2, 32>}, {pipeline_mode = #tpu.pipeline_mode<synchronous>, transform_indices = @transform_4, window_bounds = array<i64: 8, 2, 32>}, {pipeline_mode = #tpu.pipeline_mode<synchronous>, transform_indices = @transform_5, window_bounds = array<i64: 2, 32>}, {pipeline_mode = #tpu.pipeline_mode<synchronous>, transform_indices = @transform_6, window_bounds = array<i64: 2, 32>}]} {
    %c0 = arith.constant 0 : index
    %c0_0 = arith.constant 0 : index
    %0 = vector.load %arg2[%c0, %c0_0] : memref<32x128xf32, #tpu.memory_space<vmem>>, vector<32x128xf32>
    %c0_1 = arith.constant 0 : index
    %c0_2 = arith.constant 0 : index
    %1 = vector.load %arg3[%c0_1, %c0_2] : memref<2x32xf32, #tpu.memory_space<vmem>>, vector<2x32xf32>
    %c0_3 = arith.constant 0 : index
    %c0_4 = arith.constant 0 : index
    %2 = vector.load %arg4[%c0_3, %c0_4] : memref<2x32xf32, #tpu.memory_space<vmem>>, vector<2x32xf32>
    %c0_i32 = arith.constant 0 : i32
    %3 = arith.index_cast %c0_i32 : i32 to index
    %c0_5 = arith.constant 0 : index
    %c0_6 = arith.constant 0 : index
    %4 = vector.load %arg1[%3, %c0_5, %c0_6] : memref<8x2x128xf32, #tpu.memory_space<vmem>>, vector<1x2x128xf32>
    %5 = vector.shape_cast %4 : vector<1x2x128xf32> to vector<2x128xf32>
    %cst = arith.constant dense<0.000000e+00> : vector<2x128xf32>
    %6 = tpu.matmul %1, %0, %cst {dimension_numbers = #tpu.dot_dimension_numbers<[1], [0], [0], [1], [0, 0, 1, 1], [], []>} : vector<2x32xf32>, vector<32x128xf32>, vector<2x128xf32> -> vector<2x128xf32>
    %7 = arith.addf %5, %6 : vector<2x128xf32>
    %8 = arith.negf %7 : vector<2x128xf32>
    %9 = math.exp %8 : vector<2x128xf32>
    %cst_7 = arith.constant 1.000000e+00 : f32
    %10 = vector.broadcast %cst_7 : f32 to vector<2x128xf32>
    %11 = arith.addf %10, %9 : vector<2x128xf32>
    %12 = arith.divf %10, %11 : vector<2x128xf32>
    %13 = vector.extract_strided_slice %12 {offsets = [0, 0], sizes = [2, 32], strides = [1, 1]} : vector<2x128xf32> to vector<2x32xf32>
    %14 = vector.extract_strided_slice %12 {offsets = [0, 32], sizes = [2, 32], strides = [1, 1]} : vector<2x128xf32> to vector<2x32xf32>
    %15 = vector.extract_strided_slice %12 {offsets = [0, 96], sizes = [2, 32], strides = [1, 1]} : vector<2x128xf32> to vector<2x32xf32>
    %16 = vector.extract_strided_slice %7 {offsets = [0, 64], sizes = [2, 32], strides = [1, 1]} : vector<2x128xf32> to vector<2x32xf32>
    %17 = math.tanh %16 : vector<2x32xf32>
    %18 = arith.mulf %14, %2 : vector<2x32xf32>
    %19 = arith.mulf %13, %17 : vector<2x32xf32>
    %20 = arith.addf %18, %19 : vector<2x32xf32>
    %21 = math.tanh %20 : vector<2x32xf32>
    %22 = arith.mulf %15, %21 : vector<2x32xf32>
    %23 = arith.index_cast %c0_i32 : i32 to index
    %c0_8 = arith.constant 0 : index
    %c0_9 = arith.constant 0 : index
    %24 = vector.load %arg5[%23, %c0_8, %c0_9] : memref<8x2x32xf32, #tpu.memory_space<vmem>>, vector<1x2x32xf32>
    %25 = vector.shape_cast %24 : vector<1x2x32xf32> to vector<2x32xf32>
    %26 = vector.shape_cast %22 : vector<2x32xf32> to vector<1x2x32xf32>
    tpu.vector_store %arg5[%23, %c0_8, %c0_9], %26 {strides = array<i32>} : memref<8x2x32xf32, #tpu.memory_space<vmem>>, vector<1x2x32xf32>,
    %c1_i32 = arith.constant 1 : i32
    %27 = arith.index_cast %c1_i32 : i32 to index
    %c0_10 = arith.constant 0 : index
    %c0_11 = arith.constant 0 : index
    %28 = vector.load %arg1[%27, %c0_10, %c0_11] : memref<8x2x128xf32, #tpu.memory_space<vmem>>, vector<1x2x128xf32>
    %29 = vector.shape_cast %28 : vector<1x2x128xf32> to vector<2x128xf32>
    %cst_12 = arith.constant dense<0.000000e+00> : vector<2x128xf32>
    %30 = tpu.matmul %22, %0, %cst_12 {dimension_numbers = #tpu.dot_dimension_numbers<[1], [0], [0], [1], [0, 0, 1, 1], [], []>} : vector<2x32xf32>, vector<32x128xf32>, vector<2x128xf32> -> vector<2x128xf32>
    %31 = arith.addf %29, %30 : vector<2x128xf32>
    %32 = arith.negf %31 : vector<2x128xf32>
    %33 = math.exp %32 : vector<2x128xf32>
    %cst_13 = arith.constant 1.000000e+00 : f32
    %34 = vector.broadcast %cst_13 : f32 to vector<2x128xf32>
    %35 = arith.addf %34, %33 : vector<2x128xf32>
    %36 = arith.divf %34, %35 : vector<2x128xf32>
    %37 = vector.extract_strided_slice %36 {offsets = [0, 0], sizes = [2, 32], strides = [1, 1]} : vector<2x128xf32> to vector<2x32xf32>
    %38 = vector.extract_strided_slice %36 {offsets = [0, 32], sizes = [2, 32], strides = [1, 1]} : vector<2x128xf32> to vector<2x32xf32>
    %39 = vector.extract_strided_slice %36 {offsets = [0, 96], sizes = [2, 32], strides = [1, 1]} : vector<2x128xf32> to vector<2x32xf32>
    %40 = vector.extract_strided_slice %31 {offsets = [0, 64], sizes = [2, 32], strides = [1, 1]} : vector<2x128xf32> to vector<2x32xf32>
    %41 = math.tanh %40 : vector<2x32xf32>
    %42 = arith.mulf %38, %20 : vector<2x32xf32>
    %43 = arith.mulf %37, %41 : vector<2x32xf32>
    %44 = arith.addf %42, %43 : vector<2x32xf32>
    %45 = math.tanh %44 : vector<2x32xf32>
    %46 = arith.mulf %39, %45 : vector<2x32xf32>
    %47 = arith.index_cast %c1_i32 : i32 to index
    %c0_14 = arith.constant 0 : index
    %c0_15 = arith.constant 0 : index
    %48 = vector.load %arg5[%47, %c0_14, %c0_15] : memref<8x2x32xf32, #tpu.memory_space<vmem>>, vector<1x2x32xf32>
    %49 = vector.shape_cast %48 : vector<1x2x32xf32> to vector<2x32xf32>
    %50 = vector.shape_cast %46 : vector<2x32xf32> to vector<1x2x32xf32>
    tpu.vector_store %arg5[%47, %c0_14, %c0_15], %50 {strides = array<i32>} : memref<8x2x32xf32, #tpu.memory_space<vmem>>, vector<1x2x32xf32>,
    %c2_i32 = arith.constant 2 : i32
    %51 = arith.index_cast %c2_i32 : i32 to index
    %c0_16 = arith.constant 0 : index
    %c0_17 = arith.constant 0 : index
    %52 = vector.load %arg1[%51, %c0_16, %c0_17] : memref<8x2x128xf32, #tpu.memory_space<vmem>>, vector<1x2x128xf32>
    %53 = vector.shape_cast %52 : vector<1x2x128xf32> to vector<2x128xf32>
    %cst_18 = arith.constant dense<0.000000e+00> : vector<2x128xf32>
    %54 = tpu.matmul %46, %0, %cst_18 {dimension_numbers = #tpu.dot_dimension_numbers<[1], [0], [0], [1], [0, 0, 1, 1], [], []>} : vector<2x32xf32>, vector<32x128xf32>, vector<2x128xf32> -> vector<2x128xf32>
    %55 = arith.addf %53, %54 : vector<2x128xf32>
    %56 = arith.negf %55 : vector<2x128xf32>
    %57 = math.exp %56 : vector<2x128xf32>
    %cst_19 = arith.constant 1.000000e+00 : f32
    %58 = vector.broadcast %cst_19 : f32 to vector<2x128xf32>
    %59 = arith.addf %58, %57 : vector<2x128xf32>
    %60 = arith.divf %58, %59 : vector<2x128xf32>
    %61 = vector.extract_strided_slice %60 {offsets = [0, 0], sizes = [2, 32], strides = [1, 1]} : vector<2x128xf32> to vector<2x32xf32>
    %62 = vector.extract_strided_slice %60 {offsets = [0, 32], sizes = [2, 32], strides = [1, 1]} : vector<2x128xf32> to vector<2x32xf32>
    %63 = vector.extract_strided_slice %60 {offsets = [0, 96], sizes = [2, 32], strides = [1, 1]} : vector<2x128xf32> to vector<2x32xf32>
    %64 = vector.extract_strided_slice %55 {offsets = [0, 64], sizes = [2, 32], strides = [1, 1]} : vector<2x128xf32> to vector<2x32xf32>
    %65 = math.tanh %64 : vector<2x32xf32>
    %66 = arith.mulf %62, %44 : vector<2x32xf32>
    %67 = arith.mulf %61, %65 : vector<2x32xf32>
    %68 = arith.addf %66, %67 : vector<2x32xf32>
    %69 = math.tanh %68 : vector<2x32xf32>
    %70 = arith.mulf %63, %69 : vector<2x32xf32>
    %71 = arith.index_cast %c2_i32 : i32 to index
    %c0_20 = arith.constant 0 : index
    %c0_21 = arith.constant 0 : index
    %72 = vector.load %arg5[%71, %c0_20, %c0_21] : memref<8x2x32xf32, #tpu.memory_space<vmem>>, vector<1x2x32xf32>
    %73 = vector.shape_cast %72 : vector<1x2x32xf32> to vector<2x32xf32>
    %74 = vector.shape_cast %70 : vector<2x32xf32> to vector<1x2x32xf32>
    tpu.vector_store %arg5[%71, %c0_20, %c0_21], %74 {strides = array<i32>} : memref<8x2x32xf32, #tpu.memory_space<vmem>>, vector<1x2x32xf32>,
    %c3_i32 = arith.constant 3 : i32
    %75 = arith.index_cast %c3_i32 : i32 to index
    %c0_22 = arith.constant 0 : index
    %c0_23 = arith.constant 0 : index
    %76 = vector.load %arg1[%75, %c0_22, %c0_23] : memref<8x2x128xf32, #tpu.memory_space<vmem>>, vector<1x2x128xf32>
    %77 = vector.shape_cast %76 : vector<1x2x128xf32> to vector<2x128xf32>
    %cst_24 = arith.constant dense<0.000000e+00> : vector<2x128xf32>
    %78 = tpu.matmul %70, %0, %cst_24 {dimension_numbers = #tpu.dot_dimension_numbers<[1], [0], [0], [1], [0, 0, 1, 1], [], []>} : vector<2x32xf32>, vector<32x128xf32>, vector<2x128xf32> -> vector<2x128xf32>
    %79 = arith.addf %77, %78 : vector<2x128xf32>
    %80 = arith.negf %79 : vector<2x128xf32>
    %81 = math.exp %80 : vector<2x128xf32>
    %cst_25 = arith.constant 1.000000e+00 : f32
    %82 = vector.broadcast %cst_25 : f32 to vector<2x128xf32>
    %83 = arith.addf %82, %81 : vector<2x128xf32>
    %84 = arith.divf %82, %83 : vector<2x128xf32>
    %85 = vector.extract_strided_slice %84 {offsets = [0, 0], sizes = [2, 32], strides = [1, 1]} : vector<2x128xf32> to vector<2x32xf32>
    %86 = vector.extract_strided_slice %84 {offsets = [0, 32], sizes = [2, 32], strides = [1, 1]} : vector<2x128xf32> to vector<2x32xf32>
    %87 = vector.extract_strided_slice %84 {offsets = [0, 96], sizes = [2, 32], strides = [1, 1]} : vector<2x128xf32> to vector<2x32xf32>
    %88 = vector.extract_strided_slice %79 {offsets = [0, 64], sizes = [2, 32], strides = [1, 1]} : vector<2x128xf32> to vector<2x32xf32>
    %89 = math.tanh %88 : vector<2x32xf32>
    %90 = arith.mulf %86, %68 : vector<2x32xf32>
    %91 = arith.mulf %85, %89 : vector<2x32xf32>
    %92 = arith.addf %90, %91 : vector<2x32xf32>
    %93 = math.tanh %92 : vector<2x32xf32>
    %94 = arith.mulf %87, %93 : vector<2x32xf32>
    %95 = arith.index_cast %c3_i32 : i32 to index
    %c0_26 = arith.constant 0 : index
    %c0_27 = arith.constant 0 : index
    %96 = vector.load %arg5[%95, %c0_26, %c0_27] : memref<8x2x32xf32, #tpu.memory_space<vmem>>, vector<1x2x32xf32>
    %97 = vector.shape_cast %96 : vector<1x2x32xf32> to vector<2x32xf32>
    %98 = vector.shape_cast %94 : vector<2x32xf32> to vector<1x2x32xf32>
    tpu.vector_store %arg5[%95, %c0_26, %c0_27], %98 {strides = array<i32>} : memref<8x2x32xf32, #tpu.memory_space<vmem>>, vector<1x2x32xf32>,
    %c4_i32 = arith.constant 4 : i32
    %99 = arith.index_cast %c4_i32 : i32 to index
    %c0_28 = arith.constant 0 : index
    %c0_29 = arith.constant 0 : index
    %100 = vector.load %arg1[%99, %c0_28, %c0_29] : memref<8x2x128xf32, #tpu.memory_space<vmem>>, vector<1x2x128xf32>
    %101 = vector.shape_cast %100 : vector<1x2x128xf32> to vector<2x128xf32>
    %cst_30 = arith.constant dense<0.000000e+00> : vector<2x128xf32>
    %102 = tpu.matmul %94, %0, %cst_30 {dimension_numbers = #tpu.dot_dimension_numbers<[1], [0], [0], [1], [0, 0, 1, 1], [], []>} : vector<2x32xf32>, vector<32x128xf32>, vector<2x128xf32> -> vector<2x128xf32>
    %103 = arith.addf %101, %102 : vector<2x128xf32>
    %104 = arith.negf %103 : vector<2x128xf32>
    %105 = math.exp %104 : vector<2x128xf32>
    %cst_31 = arith.constant 1.000000e+00 : f32
    %106 = vector.broadcast %cst_31 : f32 to vector<2x128xf32>
    %107 = arith.addf %106, %105 : vector<2x128xf32>
    %108 = arith.divf %106, %107 : vector<2x128xf32>
    %109 = vector.extract_strided_slice %108 {offsets = [0, 0], sizes = [2, 32], strides = [1, 1]} : vector<2x128xf32> to vector<2x32xf32>
    %110 = vector.extract_strided_slice %108 {offsets = [0, 32], sizes = [2, 32], strides = [1, 1]} : vector<2x128xf32> to vector<2x32xf32>
    %111 = vector.extract_strided_slice %108 {offsets = [0, 96], sizes = [2, 32], strides = [1, 1]} : vector<2x128xf32> to vector<2x32xf32>
    %112 = vector.extract_strided_slice %103 {offsets = [0, 64], sizes = [2, 32], strides = [1, 1]} : vector<2x128xf32> to vector<2x32xf32>
    %113 = math.tanh %112 : vector<2x32xf32>
    %114 = arith.mulf %110, %92 : vector<2x32xf32>
    %115 = arith.mulf %109, %113 : vector<2x32xf32>
    %116 = arith.addf %114, %115 : vector<2x32xf32>
    %117 = math.tanh %116 : vector<2x32xf32>
    %118 = arith.mulf %111, %117 : vector<2x32xf32>
    %119 = arith.index_cast %c4_i32 : i32 to index
    %c0_32 = arith.constant 0 : index
    %c0_33 = arith.constant 0 : index
    %120 = vector.load %arg5[%119, %c0_32, %c0_33] : memref<8x2x32xf32, #tpu.memory_space<vmem>>, vector<1x2x32xf32>
    %121 = vector.shape_cast %120 : vector<1x2x32xf32> to vector<2x32xf32>
    %122 = vector.shape_cast %118 : vector<2x32xf32> to vector<1x2x32xf32>
    tpu.vector_store %arg5[%119, %c0_32, %c0_33], %122 {strides = array<i32>} : memref<8x2x32xf32, #tpu.memory_space<vmem>>, vector<1x2x32xf32>,
    %c5_i32 = arith.constant 5 : i32
    %123 = arith.index_cast %c5_i32 : i32 to index
    %c0_34 = arith.constant 0 : index
    %c0_35 = arith.constant 0 : index
    %124 = vector.load %arg1[%123, %c0_34, %c0_35] : memref<8x2x128xf32, #tpu.memory_space<vmem>>, vector<1x2x128xf32>
    %125 = vector.shape_cast %124 : vector<1x2x128xf32> to vector<2x128xf32>
    %cst_36 = arith.constant dense<0.000000e+00> : vector<2x128xf32>
    %126 = tpu.matmul %118, %0, %cst_36 {dimension_numbers = #tpu.dot_dimension_numbers<[1], [0], [0], [1], [0, 0, 1, 1], [], []>} : vector<2x32xf32>, vector<32x128xf32>, vector<2x128xf32> -> vector<2x128xf32>
    %127 = arith.addf %125, %126 : vector<2x128xf32>
    %128 = arith.negf %127 : vector<2x128xf32>
    %129 = math.exp %128 : vector<2x128xf32>
    %cst_37 = arith.constant 1.000000e+00 : f32
    %130 = vector.broadcast %cst_37 : f32 to vector<2x128xf32>
    %131 = arith.addf %130, %129 : vector<2x128xf32>
    %132 = arith.divf %130, %131 : vector<2x128xf32>
    %133 = vector.extract_strided_slice %132 {offsets = [0, 0], sizes = [2, 32], strides = [1, 1]} : vector<2x128xf32> to vector<2x32xf32>
    %134 = vector.extract_strided_slice %132 {offsets = [0, 32], sizes = [2, 32], strides = [1, 1]} : vector<2x128xf32> to vector<2x32xf32>
    %135 = vector.extract_strided_slice %132 {offsets = [0, 96], sizes = [2, 32], strides = [1, 1]} : vector<2x128xf32> to vector<2x32xf32>
    %136 = vector.extract_strided_slice %127 {offsets = [0, 64], sizes = [2, 32], strides = [1, 1]} : vector<2x128xf32> to vector<2x32xf32>
    %137 = math.tanh %136 : vector<2x32xf32>
    %138 = arith.mulf %134, %116 : vector<2x32xf32>
    %139 = arith.mulf %133, %137 : vector<2x32xf32>
    %140 = arith.addf %138, %139 : vector<2x32xf32>
    %141 = math.tanh %140 : vector<2x32xf32>
    %142 = arith.mulf %135, %141 : vector<2x32xf32>
    %143 = arith.index_cast %c5_i32 : i32 to index
    %c0_38 = arith.constant 0 : index
    %c0_39 = arith.constant 0 : index
    %144 = vector.load %arg5[%143, %c0_38, %c0_39] : memref<8x2x32xf32, #tpu.memory_space<vmem>>, vector<1x2x32xf32>
    %145 = vector.shape_cast %144 : vector<1x2x32xf32> to vector<2x32xf32>
    %146 = vector.shape_cast %142 : vector<2x32xf32> to vector<1x2x32xf32>
    tpu.vector_store %arg5[%143, %c0_38, %c0_39], %146 {strides = array<i32>} : memref<8x2x32xf32, #tpu.memory_space<vmem>>, vector<1x2x32xf32>,
    %c6_i32 = arith.constant 6 : i32
    %147 = arith.index_cast %c6_i32 : i32 to index
    %c0_40 = arith.constant 0 : index
    %c0_41 = arith.constant 0 : index
    %148 = vector.load %arg1[%147, %c0_40, %c0_41] : memref<8x2x128xf32, #tpu.memory_space<vmem>>, vector<1x2x128xf32>
    %149 = vector.shape_cast %148 : vector<1x2x128xf32> to vector<2x128xf32>
    %cst_42 = arith.constant dense<0.000000e+00> : vector<2x128xf32>
    %150 = tpu.matmul %142, %0, %cst_42 {dimension_numbers = #tpu.dot_dimension_numbers<[1], [0], [0], [1], [0, 0, 1, 1], [], []>} : vector<2x32xf32>, vector<32x128xf32>, vector<2x128xf32> -> vector<2x128xf32>
    %151 = arith.addf %149, %150 : vector<2x128xf32>
    %152 = arith.negf %151 : vector<2x128xf32>
    %153 = math.exp %152 : vector<2x128xf32>
    %cst_43 = arith.constant 1.000000e+00 : f32
    %154 = vector.broadcast %cst_43 : f32 to vector<2x128xf32>
    %155 = arith.addf %154, %153 : vector<2x128xf32>
    %156 = arith.divf %154, %155 : vector<2x128xf32>
    %157 = vector.extract_strided_slice %156 {offsets = [0, 0], sizes = [2, 32], strides = [1, 1]} : vector<2x128xf32> to vector<2x32xf32>
    %158 = vector.extract_strided_slice %156 {offsets = [0, 32], sizes = [2, 32], strides = [1, 1]} : vector<2x128xf32> to vector<2x32xf32>
    %159 = vector.extract_strided_slice %156 {offsets = [0, 96], sizes = [2, 32], strides = [1, 1]} : vector<2x128xf32> to vector<2x32xf32>
    %160 = vector.extract_strided_slice %151 {offsets = [0, 64], sizes = [2, 32], strides = [1, 1]} : vector<2x128xf32> to vector<2x32xf32>
    %161 = math.tanh %160 : vector<2x32xf32>
    %162 = arith.mulf %158, %140 : vector<2x32xf32>
    %163 = arith.mulf %157, %161 : vector<2x32xf32>
    %164 = arith.addf %162, %163 : vector<2x32xf32>
    %165 = math.tanh %164 : vector<2x32xf32>
    %166 = arith.mulf %159, %165 : vector<2x32xf32>
    %167 = arith.index_cast %c6_i32 : i32 to index
    %c0_44 = arith.constant 0 : index
    %c0_45 = arith.constant 0 : index
    %168 = vector.load %arg5[%167, %c0_44, %c0_45] : memref<8x2x32xf32, #tpu.memory_space<vmem>>, vector<1x2x32xf32>
    %169 = vector.shape_cast %168 : vector<1x2x32xf32> to vector<2x32xf32>
    %170 = vector.shape_cast %166 : vector<2x32xf32> to vector<1x2x32xf32>
    tpu.vector_store %arg5[%167, %c0_44, %c0_45], %170 {strides = array<i32>} : memref<8x2x32xf32, #tpu.memory_space<vmem>>, vector<1x2x32xf32>,
    %c7_i32 = arith.constant 7 : i32
    %171 = arith.index_cast %c7_i32 : i32 to index
    %c0_46 = arith.constant 0 : index
    %c0_47 = arith.constant 0 : index
    %172 = vector.load %arg1[%171, %c0_46, %c0_47] : memref<8x2x128xf32, #tpu.memory_space<vmem>>, vector<1x2x128xf32>
    %173 = vector.shape_cast %172 : vector<1x2x128xf32> to vector<2x128xf32>
    %cst_48 = arith.constant dense<0.000000e+00> : vector<2x128xf32>
    %174 = tpu.matmul %166, %0, %cst_48 {dimension_numbers = #tpu.dot_dimension_numbers<[1], [0], [0], [1], [0, 0, 1, 1], [], []>} : vector<2x32xf32>, vector<32x128xf32>, vector<2x128xf32> -> vector<2x128xf32>
    %175 = arith.addf %173, %174 : vector<2x128xf32>
    %176 = arith.negf %175 : vector<2x128xf32>
    %177 = math.exp %176 : vector<2x128xf32>
    %cst_49 = arith.constant 1.000000e+00 : f32
    %178 = vector.broadcast %cst_49 : f32 to vector<2x128xf32>
    %179 = arith.addf %178, %177 : vector<2x128xf32>
    %180 = arith.divf %178, %179 : vector<2x128xf32>
    %181 = vector.extract_strided_slice %180 {offsets = [0, 0], sizes = [2, 32], strides = [1, 1]} : vector<2x128xf32> to vector<2x32xf32>
    %182 = vector.extract_strided_slice %180 {offsets = [0, 32], sizes = [2, 32], strides = [1, 1]} : vector<2x128xf32> to vector<2x32xf32>
    %183 = vector.extract_strided_slice %180 {offsets = [0, 96], sizes = [2, 32], strides = [1, 1]} : vector<2x128xf32> to vector<2x32xf32>
    %184 = vector.extract_strided_slice %175 {offsets = [0, 64], sizes = [2, 32], strides = [1, 1]} : vector<2x128xf32> to vector<2x32xf32>
    %185 = math.tanh %184 : vector<2x32xf32>
    %186 = arith.mulf %182, %164 : vector<2x32xf32>
    %187 = arith.mulf %181, %185 : vector<2x32xf32>
    %188 = arith.addf %186, %187 : vector<2x32xf32>
    %189 = math.tanh %188 : vector<2x32xf32>
    %190 = arith.mulf %183, %189 : vector<2x32xf32>
    %191 = arith.index_cast %c7_i32 : i32 to index
    %c0_50 = arith.constant 0 : index
    %c0_51 = arith.constant 0 : index
    %192 = vector.load %arg5[%191, %c0_50, %c0_51] : memref<8x2x32xf32, #tpu.memory_space<vmem>>, vector<1x2x32xf32>
    %193 = vector.shape_cast %192 : vector<1x2x32xf32> to vector<2x32xf32>
    %194 = vector.shape_cast %190 : vector<2x32xf32> to vector<1x2x32xf32>
    tpu.vector_store %arg5[%191, %c0_50, %c0_51], %194 {strides = array<i32>} : memref<8x2x32xf32, #tpu.memory_space<vmem>>, vector<1x2x32xf32>,
    %c8_i32 = arith.constant 8 : i32
    %c0_52 = arith.constant 0 : index
    %c0_53 = arith.constant 0 : index
    %195 = vector.load %arg6[%c0_52, %c0_53] : memref<2x32xf32, #tpu.memory_space<vmem>>, vector<2x32xf32>
    tpu.vector_store %arg6[%c0_52, %c0_53], %190 {strides = array<i32>} : memref<2x32xf32, #tpu.memory_space<vmem>>, vector<2x32xf32>,
    %c0_54 = arith.constant 0 : index
    %c0_55 = arith.constant 0 : index
    %196 = vector.load %arg7[%c0_54, %c0_55] : memref<2x32xf32, #tpu.memory_space<vmem>>, vector<2x32xf32>
    tpu.vector_store %arg7[%c0_54, %c0_55], %188 {strides = array<i32>} : memref<2x32xf32, #tpu.memory_space<vmem>>, vector<2x32xf32>,
    return
  }
  func.func @transform_0(%arg0: i32) -> (i32, i32, i32) {
    %c0_i32 = arith.constant 0 : i32
    %c0_i32_0 = arith.constant 0 : i32
    %c0_i32_1 = arith.constant 0 : i32
    %c0_i32_2 = arith.constant 0 : i32
    return %c0_i32, %c0_i32_0, %c0_i32_1 : i32, i32, i32
  }
  func.func @transform_1(%arg0: i32) -> (i32, i32) {
    %c0_i32 = arith.constant 0 : i32
    %c0_i32_0 = arith.constant 0 : i32
    %c0_i32_1 = arith.constant 0 : i32
    return %c0_i32, %c0_i32_0 : i32, i32
  }
  func.func @transform_2(%arg0: i32) -> (i32, i32) {
    %c0_i32 = arith.constant 0 : i32
    %c0_i32_0 = arith.constant 0 : i32
    %c0_i32_1 = arith.constant 0 : i32
    return %c0_i32, %c0_i32_0 : i32, i32
  }
  func.func @transform_3(%arg0: i32) -> (i32, i32) {
    %c0_i32 = arith.constant 0 : i32
    %c0_i32_0 = arith.constant 0 : i32
    %c0_i32_1 = arith.constant 0 : i32
    return %c0_i32, %c0_i32_0 : i32, i32
  }
  func.func @transform_4(%arg0: i32) -> (i32, i32, i32) {
    %c0_i32 = arith.constant 0 : i32
    %c0_i32_0 = arith.constant 0 : i32
    %c0_i32_1 = arith.constant 0 : i32
    %c0_i32_2 = arith.constant 0 : i32
    return %c0_i32, %c0_i32_0, %c0_i32_1 : i32, i32, i32
  }
  func.func @transform_5(%arg0: i32) -> (i32, i32) {
    %c0_i32 = arith.constant 0 : i32
    %c0_i32_0 = arith.constant 0 : i32
    %c0_i32_1 = arith.constant 0 : i32
    return %c0_i32, %c0_i32_0 : i32, i32
  }
  func.func @transform_6(%arg0: i32) -> (i32, i32) {
    %c0_i32 = arith.constant 0 : i32
    %c0_i32_0 = arith.constant 0 : i32
    %c0_i32_1 = arith.constant 0 : i32
    return %c0_i32, %c0_i32_0 : i32, i32
  }
}

</mosaic_0001>

<llo_original>
// kernel: tpu_custom_call.1
$region0: #{tpu_custom_call.1}
  #allocation0 [shape = 'u32[]', space=smem, size = 0x4, offset = 0x4, fixed_abs, tag = 'smem constant byte address 0x4 - core index']
  #allocation1 [shape = 'u32[144,128]{1,0:T(1,128)}', space=vmem, size = 0x12000, scoped, tag = 'internal scratch']
  %s0 = inlined_call_operand.hbm [shape: f32[8,2,128], index: 0, kind: input, shape index: {}]
  %s1 = inlined_call_operand.hbm [shape: f32[32,128], index: 1, kind: input, shape index: {}]
  %s2 = inlined_call_operand.vmem [shape: f32[2,32], index: 2, kind: input, shape index: {}]
  %s3 = inlined_call_operand.vmem [shape: f32[2,32], index: 3, kind: input, shape index: {}]
  %s4 = inlined_call_operand.hbm [shape: f32[8,2,32], index: 4, kind: output, shape index: {0}]
  %s5 = inlined_call_operand.hbm [shape: f32[2,32], index: 5, kind: output, shape index: {1}]
  %s6 = inlined_call_operand.hbm [shape: f32[2,32], index: 6, kind: output, shape index: {2}]
  %7 = xla_tuple %s4, %s5, %s6
  %s8 = sld [smem:[#allocation0]]
  $region50: #{tpu_custom_call.1} parent=0
    _
  %s10 = ssub.s32 1, %s8
  %s11 = scalar_select 0, %s10, %s8
  $region1: #{tpu_custom_call.1} parent=0
    #allocation2 [shape = 'u8[8192]{0}', space=vmem, size = 0x2000, scoped, tag = 'input window, operand 0, single buffered']
    #allocation3 [shape = 's32[1]{0}', space=sflag, size = 0x4, scoped, tag = 'scoped memory for tpu_custom_call.1']
    #allocation4 [shape = 's32[1]{0}', space=sflag, size = 0x4, scoped, tag = 'scoped memory for tpu_custom_call.1']
    #allocation5 [shape = 'u8[16384]{0}', space=vmem, size = 0x4000, scoped, tag = 'input window, operand 1, single buffered']
    #allocation6 [shape = 's32[1]{0}', space=sflag, size = 0x4, scoped, tag = 'scoped memory for tpu_custom_call.1']
    #allocation7 [shape = 'u8[8192]{0}', space=vmem, size = 0x2000, scoped, tag = 'output window, operand 0, single buffered']
    #allocation8 [shape = 'u8[1024]{0}', space=vmem, size = 0x400, scoped, tag = 'output window, operand 1, single buffered']
    #allocation9 [shape = 's32[1]{0}', space=sflag, size = 0x4, scoped, tag = 'scoped memory for tpu_custom_call.1']
    #allocation10 [shape = 'u8[1024]{0}', space=vmem, size = 0x400, scoped, tag = 'output window, operand 2, single buffered']
    %12 = vsyncpa [#allocation3], 0
    %13 = vsyncpa [#allocation6], 0
    %14 = vsyncpa [#allocation4], 0
    %15 = vsyncpa [#allocation9], 0
    // Predicated region
    $region2: #{tpu_custom_call.1} parent=1 // pred_check
      _
    $region3: #{tpu_custom_call.1} parent=1 // pred_check_branch
      %17 = sbr.rel (0) target = $region5
    $region4: #{tpu_custom_call.1} parent=1 // pred_region
      %s19 = ssub.s32 256, 256
      %20 = vsyncadd [#allocation3], %s19
      %s21 = sshll.u32 [#allocation2], 4
      %s22 = int_to_ptr.vmem [resolvable:$true] %s21
      %27 = dma.hbm_to_vmem [thread:$0]  %s0, 256, %s22, [#allocation3], 32, 32, 2
    $region5: #{tpu_custom_call.1} parent=1 // pred_fallthru
      _
    // Predicated region
    $region6: #{tpu_custom_call.1} parent=1 // pred_check
      _
    $region7: #{tpu_custom_call.1} parent=1 // pred_check_branch
      %29 = sbr.rel (0) target = $region9
    $region8: #{tpu_custom_call.1} parent=1 // pred_region
      %s31 = ssub.s32 512, 512
      %32 = vsyncadd [#allocation6], %s31
      %s33 = sshll.u32 [#allocation5], 4
      %s34 = int_to_ptr.vmem [resolvable:$true] %s33
      %39 = dma.hbm_to_vmem [thread:$0]  %s1, 512, %s34, [#allocation6], 128, 128, 8
    $region9: #{tpu_custom_call.1} parent=1 // pred_fallthru
      _
    // Predicated region
    $region10: #{tpu_custom_call.1} parent=1 // pred_check
      _
    $region11: #{tpu_custom_call.1} parent=1 // pred_check_branch
      %41 = sbr.rel (0) target = $region13
    $region12: #{tpu_custom_call.1} parent=1 // pred_region
      _
    $region13: #{tpu_custom_call.1} parent=1 // pred_fallthru
      _
    // Predicated region
    $region14: #{tpu_custom_call.1} parent=1 // pred_check
      _
    $region15: #{tpu_custom_call.1} parent=1 // pred_check_branch
      %43 = sbr.rel (0) target = $region17
    $region16: #{tpu_custom_call.1} parent=1 // pred_region
      _
    $region17: #{tpu_custom_call.1} parent=1 // pred_fallthru
      _
    // Predicated region
    $region18: #{tpu_custom_call.1} parent=1 // pred_check
      _
    $region19: #{tpu_custom_call.1} parent=1 // pred_check_branch
      %45 = sbr.rel (0) target = $region21
    $region20: #{tpu_custom_call.1} parent=1 // pred_region
      %46 = dma.done [#allocation3], 256
    $region21: #{tpu_custom_call.1} parent=1 // pred_fallthru
      _
    // Predicated region
    $region22: #{tpu_custom_call.1} parent=1 // pred_check
      _
    $region23: #{tpu_custom_call.1} parent=1 // pred_check_branch
      %48 = sbr.rel (0) target = $region25
    $region24: #{tpu_custom_call.1} parent=1 // pred_region
      %49 = dma.done [#allocation6], 512
    $region25: #{tpu_custom_call.1} parent=1 // pred_fallthru
      _
    %v50 = vld [vmem:[#allocation5] sm:$0xff]
    %v51 = vld [vmem:[#allocation5 + $0x8] sm:$0xff]
    %v52 = vld [vmem:[#allocation5 + $0x10] sm:$0xff]
    %v53 = vld [vmem:[#allocation5 + $0x18] sm:$0xff]
    %v54 = vld [vmem:[%s2] sm:$0x3]
    %v55 = vld [vmem:[%s3] sm:$0x3]
    %v56 = vld [vmem:[#allocation2] sm:$0x3]
    %vm57 = vcmask 261120
    %v59 = vsel %vm57, %v54, 0
    %61 = vmatprep.subr.mxu0 0.0
    %62 = vmatpush1.msra.mxu0 %v50
    %63 = vmatprep.subr.mxu0 0.0
    %64 = vmatpush1.msra.mxu0 %v51
    %65 = vmatprep.subr.mxu0 0.0
    %66 = vmatpush1.msra.mxu0 %v52
    %67 = vmatprep.subr.mxu0 0.0
    %68 = vmatpush1.msra.mxu0 %v53
    %69 = vmatprep.subr.mxu0 0.0
    %70 = vmatpush1.msra.mxu0 0.0
    %71 = vmatprep.subr.mxu0 0.0
    %72 = vmatpush1.msra.mxu0 0.0
    %73 = vmatprep.subr.mxu0 0.0
    %74 = vmatpush1.msra.mxu0 0.0
    %75 = vmatprep.subr.mxu0 0.0
    %76 = vmatpush1.msra.mxu0 0.0
    %77 = vmatprep.subr.mxu0 0.0
    %78 = vmatpush1.msra.mxu0 0.0
    %79 = vmatprep.subr.mxu0 0.0
    %80 = vmatpush1.msra.mxu0 0.0
    %81 = vmatprep.subr.mxu0 0.0
    %82 = vmatpush1.msra.mxu0 0.0
    %83 = vmatprep.subr.mxu0 0.0
    %84 = vmatpush1.msra.mxu0 0.0
    %85 = vmatprep.subr.mxu0 0.0
    %86 = vmatpush1.msra.mxu0 0.0
    %87 = vmatprep.subr.mxu0 0.0
    %88 = vmatpush1.msra.mxu0 0.0
    %89 = vmatprep.subr.mxu0 0.0
    %90 = vmatpush1.msra.mxu0 0.0
    %91 = vmatprep.subr.mxu0 0.0
    %92 = vmatpush1.msra.mxu0 0.0
    %93 = vmatprep.subr.mxu0 0.0
    %94 = vmatpush1.msra.mxu0 0.0
    %95 = vmatprep.subr.mxu0 0.0
    %96 = vmatpush1.msra.mxu0 0.0
    %97 = vmatprep.subr.mxu0 0.0
    %98 = vmatpush1.msra.mxu0 0.0
    %99 = vmatprep.subr.mxu0 0.0
    %100 = vmatpush1.msra.mxu0 0.0
    %101 = vmatprep.subr.mxu0 0.0
    %102 = vmatpush1.msra.mxu0 0.0
    %103 = vmatprep.subr.mxu0 0.0
    %104 = vmatpush1.msra.mxu0 0.0
    %105 = vmatprep.subr.mxu0 0.0
    %106 = vmatpush1.msra.mxu0 0.0
    %107 = vmatprep.subr.mxu0 0.0
    %108 = vmatpush1.msra.mxu0 0.0
    %109 = vmatprep.subr.mxu0 0.0
    %110 = vmatpush1.msra.mxu0 0.0
    %111 = vmatprep.subr.mxu0 0.0
    %112 = vmatpush1.msra.mxu0 0.0
    %113 = vmatprep.subr.mxu0 0.0
    %114 = vmatpush1.msra.mxu0 0.0
    %115 = vmatprep.subr.mxu0 0.0
    %116 = vmatpush1.msra.mxu0 0.0
    %117 = vmatprep.subr.mxu0 0.0
    %118 = vmatpush1.msra.mxu0 0.0
    %119 = vmatprep.subr.mxu0 0.0
    %120 = vmatpush1.msra.mxu0 0.0
    %121 = vmatprep.subr.mxu0 0.0
    %122 = vmatpush1.msra.mxu0 0.0
    %123 = vmatprep.subr.mxu0 0.0
    %124 = vmatpush1.msra.mxu0 0.0
    %125 = vmatprep.mubr.f32.mxu0 0.0
    %126 = vmatmul.mubr.f32.gmra.mrb[0].mxu0 %v59
    %v127 = vpop.f32.mrb[0].mxu0
    %v128 = vadd.f32 0.0, %v127
    %v129 = vpop.f32.mrb[0].mxu0
    %130 = vdwg.mxu0
    %v131 = vadd.f32 %v56, %v128
    %v132 = vxor.u32 %v131, 2147483648
    %v133 = vmul.f32 %v132, 1.442695
    %v134 = vpow.pop %v133
    %v135 = vadd.f32 %v134, 1.0
    %v136 = vrcp.pop %v135
    %v137 = vmul.f32 1.0, %v136
    %v138 = vtanh.pop %v131
    %140 = vrot.lane.b32.xlu0 %v55, 32
    %v141 = vpop.permute.xlu0 %140
    %v143 = vmul.f32 %v137, %v141
    %145 = vrot.lane.b32.xlu0 %v138, 64
    %v146 = vpop.permute.xlu0 %145
    %v148 = vmul.f32 %v137, %v146
    %150 = vrot.lane.b32.xlu0 %v148, 32
    %v151 = vpop.permute.xlu0 %150
    %v153 = vadd.f32 %v143, %v151
    %v154 = vtanh.pop %v153
    %156 = vrot.lane.b32.xlu0 %v154, 64
    %v157 = vpop.permute.xlu0 %156
    %v159 = vmul.f32 %v137, %v157
    %161 = vrot.lane.b32.xlu0 %v159, 32
    %v162 = vpop.permute.xlu0 %161
    %vm164 = vcmask 254976
    %165 = vst.msk [vmem:[#allocation7] sm:$0x3] %vm164, %v162
    %s166 = scalar_lea.vmem [#allocation2], 2
    %v167 = vld [vmem:[%s166] sm:$0x3]
    %v168 = vsel %vm57, %v162, 0
    %170 = vmatprep.subr.mxu0 0.0
    %171 = vmatpush1.msra.mxu0 %v50
    %172 = vmatprep.subr.mxu0 0.0
    %173 = vmatpush1.msra.mxu0 %v51
    %174 = vmatprep.subr.mxu0 0.0
    %175 = vmatpush1.msra.mxu0 %v52
    %176 = vmatprep.subr.mxu0 0.0
    %177 = vmatpush1.msra.mxu0 %v53
    %178 = vmatprep.subr.mxu0 0.0
    %179 = vmatpush1.msra.mxu0 0.0
    %180 = vmatprep.subr.mxu0 0.0
    %181 = vmatpush1.msra.mxu0 0.0
    %182 = vmatprep.subr.mxu0 0.0
    %183 = vmatpush1.msra.mxu0 0.0
    %184 = vmatprep.subr.mxu0 0.0
    %185 = vmatpush1.msra.mxu0 0.0
    %186 = vmatprep.subr.mxu0 0.0
    %187 = vmatpush1.msra.mxu0 0.0
    %188 = vmatprep.subr.mxu0 0.0
    %189 = vmatpush1.msra.mxu0 0.0
    %190 = vmatprep.subr.mxu0 0.0
    %191 = vmatpush1.msra.mxu0 0.0
    %192 = vmatprep.subr.mxu0 0.0
    %193 = vmatpush1.msra.mxu0 0.0
    %194 = vmatprep.subr.mxu0 0.0
    %195 = vmatpush1.msra.mxu0 0.0
    %196 = vmatprep.subr.mxu0 0.0
    %197 = vmatpush1.msra.mxu0 0.0
    %198 = vmatprep.subr.mxu0 0.0
    %199 = vmatpush1.msra.mxu0 0.0
    %200 = vmatprep.subr.mxu0 0.0
    %201 = vmatpush1.msra.mxu0 0.0
    %202 = vmatprep.subr.mxu0 0.0
    %203 = vmatpush1.msra.mxu0 0.0
    %204 = vmatprep.subr.mxu0 0.0
    %205 = vmatpush1.msra.mxu0 0.0
    %206 = vmatprep.subr.mxu0 0.0
    %207 = vmatpush1.msra.mxu0 0.0
    %208 = vmatprep.subr.mxu0 0.0
    %209 = vmatpush1.msra.mxu0 0.0
    %210 = vmatprep.subr.mxu0 0.0
    %211 = vmatpush1.msra.mxu0 0.0
    %212 = vmatprep.subr.mxu0 0.0
    %213 = vmatpush1.msra.mxu0 0.0
    %214 = vmatprep.subr.mxu0 0.0
    %215 = vmatpush1.msra.mxu0 0.0
    %216 = vmatprep.subr.mxu0 0.0
    %217 = vmatpush1.msra.mxu0 0.0
    %218 = vmatprep.subr.mxu0 0.0
    %219 = vmatpush1.msra.mxu0 0.0
    %220 = vmatprep.subr.mxu0 0.0
    %221 = vmatpush1.msra.mxu0 0.0
    %222 = vmatprep.subr.mxu0 0.0
    %223 = vmatpush1.msra.mxu0 0.0
    %224 = vmatprep.subr.mxu0 0.0
    %225 = vmatpush1.msra.mxu0 0.0
    %226 = vmatprep.subr.mxu0 0.0
    %227 = vmatpush1.msra.mxu0 0.0
    %228 = vmatprep.subr.mxu0 0.0
    %229 = vmatpush1.msra.mxu0 0.0
    %230 = vmatprep.subr.mxu0 0.0
    %231 = vmatpush1.msra.mxu0 0.0
    %232 = vmatprep.subr.mxu0 0.0
    %233 = vmatpush1.msra.mxu0 0.0
    %234 = vmatprep.mubr.f32.mxu0 0.0
    %235 = vmatmul.mubr.f32.gmra.mrb[0].mxu0 %v168
    %v236 = vpop.f32.mrb[0].mxu0
    %v237 = vadd.f32 0.0, %v236
    %v238 = vpop.f32.mrb[0].mxu0
    %239 = vdwg.mxu0
    %v240 = vadd.f32 %v167, %v237
    %v241 = vxor.u32 %v240, 2147483648
    %v242 = vmul.f32 %v241, 1.442695
    %v243 = vpow.pop %v242
    %v244 = vadd.f32 %v243, 1.0
    %v245 = vrcp.pop %v244
    %v246 = vmul.f32 1.0, %v245
    %v247 = vtanh.pop %v240
    %v248 = vmul.f32 %v246, %v153
    %250 = vrot.lane.b32.xlu0 %v247, 64
    %v251 = vpop.permute.xlu0 %250
    %v253 = vmul.f32 %v246, %v251
    %255 = vrot.lane.b32.xlu0 %v253, 32
    %v256 = vpop.permute.xlu0 %255
    %v258 = vadd.f32 %v248, %v256
    %v259 = vtanh.pop %v258
    %261 = vrot.lane.b32.xlu0 %v259, 64
    %v262 = vpop.permute.xlu0 %261
    %v264 = vmul.f32 %v246, %v262
    %266 = vrot.lane.b32.xlu0 %v264, 32
    %v267 = vpop.permute.xlu0 %266
    %s269 = scalar_lea.vmem [#allocation7], 2
    %270 = vst.msk [vmem:[%s269] sm:$0x3] %vm164, %v267
    %s271 = scalar_lea.vmem [#allocation2], 4
    %v272 = vld [vmem:[%s271] sm:$0x3]
    %v273 = vsel %vm57, %v267, 0
    %275 = vmatprep.subr.mxu0 0.0
    %276 = vmatpush1.msra.mxu0 %v50
    %277 = vmatprep.subr.mxu0 0.0
    %278 = vmatpush1.msra.mxu0 %v51
    %279 = vmatprep.subr.mxu0 0.0
    %280 = vmatpush1.msra.mxu0 %v52
    %281 = vmatprep.subr.mxu0 0.0
    %282 = vmatpush1.msra.mxu0 %v53
    %283 = vmatprep.subr.mxu0 0.0
    %284 = vmatpush1.msra.mxu0 0.0
    %285 = vmatprep.subr.mxu0 0.0
    %286 = vmatpush1.msra.mxu0 0.0
    %287 = vmatprep.subr.mxu0 0.0
    %288 = vmatpush1.msra.mxu0 0.0
    %289 = vmatprep.subr.mxu0 0.0
    %290 = vmatpush1.msra.mxu0 0.0
    %291 = vmatprep.subr.mxu0 0.0
    %292 = vmatpush1.msra.mxu0 0.0
    %293 = vmatprep.subr.mxu0 0.0
    %294 = vmatpush1.msra.mxu0 0.0
    %295 = vmatprep.subr.mxu0 0.0
    %296 = vmatpush1.msra.mxu0 0.0
    %297 = vmatprep.subr.mxu0 0.0
    %298 = vmatpush1.msra.mxu0 0.0
    %299 = vmatprep.subr.mxu0 0.0
    %300 = vmatpush1.msra.mxu0 0.0
    %301 = vmatprep.subr.mxu0 0.0
    %302 = vmatpush1.msra.mxu0 0.0
    %303 = vmatprep.subr.mxu0 0.0
    %304 = vmatpush1.msra.mxu0 0.0
    %305 = vmatprep.subr.mxu0 0.0
    %306 = vmatpush1.msra.mxu0 0.0
    %307 = vmatprep.subr.mxu0 0.0
    %308 = vmatpush1.msra.mxu0 0.0
    %309 = vmatprep.subr.mxu0 0.0
    %310 = vmatpush1.msra.mxu0 0.0
    %311 = vmatprep.subr.mxu0 0.0
    %312 = vmatpush1.msra.mxu0 0.0
    %313 = vmatprep.subr.mxu0 0.0
    %314 = vmatpush1.msra.mxu0 0.0
    %315 = vmatprep.subr.mxu0 0.0
    %316 = vmatpush1.msra.mxu0 0.0
    %317 = vmatprep.subr.mxu0 0.0
    %318 = vmatpush1.msra.mxu0 0.0
    %319 = vmatprep.subr.mxu0 0.0
    %320 = vmatpush1.msra.mxu0 0.0
    %321 = vmatprep.subr.mxu0 0.0
    %322 = vmatpush1.msra.mxu0 0.0
    %323 = vmatprep.subr.mxu0 0.0
    %324 = vmatpush1.msra.mxu0 0.0
    %325 = vmatprep.subr.mxu0 0.0
    %326 = vmatpush1.msra.mxu0 0.0
    %327 = vmatprep.subr.mxu0 0.0
    %328 = vmatpush1.msra.mxu0 0.0
    %329 = vmatprep.subr.mxu0 0.0
    %330 = vmatpush1.msra.mxu0 0.0
    %331 = vmatprep.subr.mxu0 0.0
    %332 = vmatpush1.msra.mxu0 0.0
    %333 = vmatprep.subr.mxu0 0.0
    %334 = vmatpush1.msra.mxu0 0.0
    %335 = vmatprep.subr.mxu0 0.0
    %336 = vmatpush1.msra.mxu0 0.0
    %337 = vmatprep.subr.mxu0 0.0
    %338 = vmatpush1.msra.mxu0 0.0
    %339 = vmatprep.mubr.f32.mxu0 0.0
    %340 = vmatmul.mubr.f32.gmra.mrb[0].mxu0 %v273
    %v341 = vpop.f32.mrb[0].mxu0
    %v342 = vadd.f32 0.0, %v341
    %v343 = vpop.f32.mrb[0].mxu0
    %344 = vdwg.mxu0
    %v345 = vadd.f32 %v272, %v342
    %v346 = vxor.u32 %v345, 2147483648
    %v347 = vmul.f32 %v346, 1.442695
    %v348 = vpow.pop %v347
    %v349 = vadd.f32 %v348, 1.0
    %v350 = vrcp.pop %v349
    %v351 = vmul.f32 1.0, %v350
    %v352 = vtanh.pop %v345
    %v353 = vmul.f32 %v351, %v258
    %355 = vrot.lane.b32.xlu0 %v352, 64
    %v356 = vpop.permute.xlu0 %355
    %v358 = vmul.f32 %v351, %v356
    %360 = vrot.lane.b32.xlu0 %v358, 32
    %v361 = vpop.permute.xlu0 %360
    %v363 = vadd.f32 %v353, %v361
    %v364 = vtanh.pop %v363
    %366 = vrot.lane.b32.xlu0 %v364, 64
    %v367 = vpop.permute.xlu0 %366
    %v369 = vmul.f32 %v351, %v367
    %371 = vrot.lane.b32.xlu0 %v369, 32
    %v372 = vpop.permute.xlu0 %371
    %s374 = scalar_lea.vmem [#allocation7], 4
    %375 = vst.msk [vmem:[%s374] sm:$0x3] %vm164, %v372
    %s376 = scalar_lea.vmem [#allocation2], 6
    %v377 = vld [vmem:[%s376] sm:$0x3]
    %v378 = vsel %vm57, %v372, 0
    %380 = vmatprep.subr.mxu0 0.0
    %381 = vmatpush1.msra.mxu0 %v50
    %382 = vmatprep.subr.mxu0 0.0
    %383 = vmatpush1.msra.mxu0 %v51
    %384 = vmatprep.subr.mxu0 0.0
    %385 = vmatpush1.msra.mxu0 %v52
    %386 = vmatprep.subr.mxu0 0.0
    %387 = vmatpush1.msra.mxu0 %v53
    %388 = vmatprep.subr.mxu0 0.0
    %389 = vmatpush1.msra.mxu0 0.0
    %390 = vmatprep.subr.mxu0 0.0
    %391 = vmatpush1.msra.mxu0 0.0
    %392 = vmatprep.subr.mxu0 0.0
    %393 = vmatpush1.msra.mxu0 0.0
    %394 = vmatprep.subr.mxu0 0.0
    %395 = vmatpush1.msra.mxu0 0.0
    %396 = vmatprep.subr.mxu0 0.0
    %397 = vmatpush1.msra.mxu0 0.0
    %398 = vmatprep.subr.mxu0 0.0
    %399 = vmatpush1.msra.mxu0 0.0
    %400 = vmatprep.subr.mxu0 0.0
    %401 = vmatpush1.msra.mxu0 0.0
    %402 = vmatprep.subr.mxu0 0.0
    %403 = vmatpush1.msra.mxu0 0.0
    %404 = vmatprep.subr.mxu0 0.0
    %405 = vmatpush1.msra.mxu0 0.0
    %406 = vmatprep.subr.mxu0 0.0
    %407 = vmatpush1.msra.mxu0 0.0
    %408 = vmatprep.subr.mxu0 0.0
    %409 = vmatpush1.msra.mxu0 0.0
    %410 = vmatprep.subr.mxu0 0.0
    %411 = vmatpush1.msra.mxu0 0.0
    %412 = vmatprep.subr.mxu0 0.0
    %413 = vmatpush1.msra.mxu0 0.0
    %414 = vmatprep.subr.mxu0 0.0
    %415 = vmatpush1.msra.mxu0 0.0
    %416 = vmatprep.subr.mxu0 0.0
    %417 = vmatpush1.msra.mxu0 0.0
    %418 = vmatprep.subr.mxu0 0.0
    %419 = vmatpush1.msra.mxu0 0.0
    %420 = vmatprep.subr.mxu0 0.0
    %421 = vmatpush1.msra.mxu0 0.0
    %422 = vmatprep.subr.mxu0 0.0
    %423 = vmatpush1.msra.mxu0 0.0
    %424 = vmatprep.subr.mxu0 0.0
    %425 = vmatpush1.msra.mxu0 0.0
    %426 = vmatprep.subr.mxu0 0.0
    %427 = vmatpush1.msra.mxu0 0.0
    %428 = vmatprep.subr.mxu0 0.0
    %429 = vmatpush1.msra.mxu0 0.0
    %430 = vmatprep.subr.mxu0 0.0
    %431 = vmatpush1.msra.mxu0 0.0
    %432 = vmatprep.subr.mxu0 0.0
    %433 = vmatpush1.msra.mxu0 0.0
    %434 = vmatprep.subr.mxu0 0.0
    %435 = vmatpush1.msra.mxu0 0.0
    %436 = vmatprep.subr.mxu0 0.0
    %437 = vmatpush1.msra.mxu0 0.0
    %438 = vmatprep.subr.mxu0 0.0
    %439 = vmatpush1.msra.mxu0 0.0
    %440 = vmatprep.subr.mxu0 0.0
    %441 = vmatpush1.msra.mxu0 0.0
    %442 = vmatprep.subr.mxu0 0.0
    %443 = vmatpush1.msra.mxu0 0.0
    %444 = vmatprep.mubr.f32.mxu0 0.0
    %445 = vmatmul.mubr.f32.gmra.mrb[0].mxu0 %v378
    %v446 = vpop.f32.mrb[0].mxu0
    %v447 = vadd.f32 0.0, %v446
    %v448 = vpop.f32.mrb[0].mxu0
    %449 = vdwg.mxu0
    %v450 = vadd.f32 %v377, %v447
    %v451 = vxor.u32 %v450, 2147483648
    %v452 = vmul.f32 %v451, 1.442695
    %v453 = vpow.pop %v452
    %v454 = vadd.f32 %v453, 1.0
    %v455 = vrcp.pop %v454
    %v456 = vmul.f32 1.0, %v455
    %v457 = vtanh.pop %v450
    %v458 = vmul.f32 %v456, %v363
    %460 = vrot.lane.b32.xlu0 %v457, 64
    %v461 = vpop.permute.xlu0 %460
    %v463 = vmul.f32 %v456, %v461
    %465 = vrot.lane.b32.xlu0 %v463, 32
    %v466 = vpop.permute.xlu0 %465
    %v468 = vadd.f32 %v458, %v466
    %v469 = vtanh.pop %v468
    %471 = vrot.lane.b32.xlu0 %v469, 64
    %v472 = vpop.permute.xlu0 %471
    %v474 = vmul.f32 %v456, %v472
    %476 = vrot.lane.b32.xlu0 %v474, 32
    %v477 = vpop.permute.xlu0 %476
    %s479 = scalar_lea.vmem [#allocation7], 6
    %480 = vst.msk [vmem:[%s479] sm:$0x3] %vm164, %v477
    %s481 = scalar_lea.vmem [#allocation2], 8
    %v482 = vld [vmem:[%s481] sm:$0x3]
    %v483 = vsel %vm57, %v477, 0
    %485 = vmatprep.subr.mxu0 0.0
    %486 = vmatpush1.msra.mxu0 %v50
    %487 = vmatprep.subr.mxu0 0.0
    %488 = vmatpush1.msra.mxu0 %v51
    %489 = vmatprep.subr.mxu0 0.0
    %490 = vmatpush1.msra.mxu0 %v52
    %491 = vmatprep.subr.mxu0 0.0
    %492 = vmatpush1.msra.mxu0 %v53
    %493 = vmatprep.subr.mxu0 0.0
    %494 = vmatpush1.msra.mxu0 0.0
    %495 = vmatprep.subr.mxu0 0.0
    %496 = vmatpush1.msra.mxu0 0.0
    %497 = vmatprep.subr.mxu0 0.0
    %498 = vmatpush1.msra.mxu0 0.0
    %499 = vmatprep.subr.mxu0 0.0
    %500 = vmatpush1.msra.mxu0 0.0
    %501 = vmatprep.subr.mxu0 0.0
    %502 = vmatpush1.msra.mxu0 0.0
    %503 = vmatprep.subr.mxu0 0.0
    %504 = vmatpush1.msra.mxu0 0.0
    %505 = vmatprep.subr.mxu0 0.0
    %506 = vmatpush1.msra.mxu0 0.0
    %507 = vmatprep.subr.mxu0 0.0
    %508 = vmatpush1.msra.mxu0 0.0
    %509 = vmatprep.subr.mxu0 0.0
    %510 = vmatpush1.msra.mxu0 0.0
    %511 = vmatprep.subr.mxu0 0.0
    %512 = vmatpush1.msra.mxu0 0.0
    %513 = vmatprep.subr.mxu0 0.0
    %514 = vmatpush1.msra.mxu0 0.0
    %515 = vmatprep.subr.mxu0 0.0
    %516 = vmatpush1.msra.mxu0 0.0
    %517 = vmatprep.subr.mxu0 0.0
    %518 = vmatpush1.msra.mxu0 0.0
    %519 = vmatprep.subr.mxu0 0.0
    %520 = vmatpush1.msra.mxu0 0.0
    %521 = vmatprep.subr.mxu0 0.0
    %522 = vmatpush1.msra.mxu0 0.0
    %523 = vmatprep.subr.mxu0 0.0
    %524 = vmatpush1.msra.mxu0 0.0
    %525 = vmatprep.subr.mxu0 0.0
    %526 = vmatpush1.msra.mxu0 0.0
    %527 = vmatprep.subr.mxu0 0.0
    %528 = vmatpush1.msra.mxu0 0.0
    %529 = vmatprep.subr.mxu0 0.0
    %530 = vmatpush1.msra.mxu0 0.0
    %531 = vmatprep.subr.mxu0 0.0
    %532 = vmatpush1.msra.mxu0 0.0
    %533 = vmatprep.subr.mxu0 0.0
    %534 = vmatpush1.msra.mxu0 0.0
    %535 = vmatprep.subr.mxu0 0.0
    %536 = vmatpush1.msra.mxu0 0.0
    %537 = vmatprep.subr.mxu0 0.0
    %538 = vmatpush1.msra.mxu0 0.0
    %539 = vmatprep.subr.mxu0 0.0
    %540 = vmatpush1.msra.mxu0 0.0
    %541 = vmatprep.subr.mxu0 0.0
    %542 = vmatpush1.msra.mxu0 0.0
    %543 = vmatprep.subr.mxu0 0.0
    %544 = vmatpush1.msra.mxu0 0.0
    %545 = vmatprep.subr.mxu0 0.0
    %546 = vmatpush1.msra.mxu0 0.0
    %547 = vmatprep.subr.mxu0 0.0
    %548 = vmatpush1.msra.mxu0 0.0
    %549 = vmatprep.mubr.f32.mxu0 0.0
    %550 = vmatmul.mubr.f32.gmra.mrb[0].mxu0 %v483
    %v551 = vpop.f32.mrb[0].mxu0
    %v552 = vadd.f32 0.0, %v551
    %v553 = vpop.f32.mrb[0].mxu0
    %554 = vdwg.mxu0
    %v555 = vadd.f32 %v482, %v552
    %v556 = vxor.u32 %v555, 2147483648
    %v557 = vmul.f32 %v556, 1.442695
    %v558 = vpow.pop %v557
    %v559 = vadd.f32 %v558, 1.0
    %v560 = vrcp.pop %v559
    %v561 = vmul.f32 1.0, %v560
    %v562 = vtanh.pop %v555
    %v563 = vmul.f32 %v561, %v468
    %565 = vrot.lane.b32.xlu0 %v562, 64
    %v566 = vpop.permute.xlu0 %565
    %v568 = vmul.f32 %v561, %v566
    %570 = vrot.lane.b32.xlu0 %v568, 32
    %v571 = vpop.permute.xlu0 %570
    %v573 = vadd.f32 %v563, %v571
    %v574 = vtanh.pop %v573
    %576 = vrot.lane.b32.xlu0 %v574, 64
    %v577 = vpop.permute.xlu0 %576
    %v579 = vmul.f32 %v561, %v577
    %581 = vrot.lane.b32.xlu0 %v579, 32
    %v582 = vpop.permute.xlu0 %581
    %s584 = scalar_lea.vmem [#allocation7], 8
    %585 = vst.msk [vmem:[%s584] sm:$0x3] %vm164, %v582
    %s586 = scalar_lea.vmem [#allocation2], 10
    %v587 = vld [vmem:[%s586] sm:$0x3]
    %v588 = vsel %vm57, %v582, 0
    %590 = vmatprep.subr.mxu0 0.0
    %591 = vmatpush1.msra.mxu0 %v50
    %592 = vmatprep.subr.mxu0 0.0
    %593 = vmatpush1.msra.mxu0 %v51
    %594 = vmatprep.subr.mxu0 0.0
    %595 = vmatpush1.msra.mxu0 %v52
    %596 = vmatprep.subr.mxu0 0.0
    %597 = vmatpush1.msra.mxu0 %v53
    %598 = vmatprep.subr.mxu0 0.0
    %599 = vmatpush1.msra.mxu0 0.0
    %600 = vmatprep.subr.mxu0 0.0
    %601 = vmatpush1.msra.mxu0 0.0
    %602 = vmatprep.subr.mxu0 0.0
    %603 = vmatpush1.msra.mxu0 0.0
    %604 = vmatprep.subr.mxu0 0.0
    %605 = vmatpush1.msra.mxu0 0.0
    %606 = vmatprep.subr.mxu0 0.0
    %607 = vmatpush1.msra.mxu0 0.0
    %608 = vmatprep.subr.mxu0 0.0
    %609 = vmatpush1.msra.mxu0 0.0
    %610 = vmatprep.subr.mxu0 0.0
    %611 = vmatpush1.msra.mxu0 0.0
    %612 = vmatprep.subr.mxu0 0.0
    %613 = vmatpush1.msra.mxu0 0.0
    %614 = vmatprep.subr.mxu0 0.0
    %615 = vmatpush1.msra.mxu0 0.0
    %616 = vmatprep.subr.mxu0 0.0
    %617 = vmatpush1.msra.mxu0 0.0
    %618 = vmatprep.subr.mxu0 0.0
    %619 = vmatpush1.msra.mxu0 0.0
    %620 = vmatprep.subr.mxu0 0.0
    %621 = vmatpush1.msra.mxu0 0.0
    %622 = vmatprep.subr.mxu0 0.0
    %623 = vmatpush1.msra.mxu0 0.0
    %624 = vmatprep.subr.mxu0 0.0
    %625 = vmatpush1.msra.mxu0 0.0
    %626 = vmatprep.subr.mxu0 0.0
    %627 = vmatpush1.msra.mxu0 0.0
    %628 = vmatprep.subr.mxu0 0.0
    %629 = vmatpush1.msra.mxu0 0.0
    %630 = vmatprep.subr.mxu0 0.0
    %631 = vmatpush1.msra.mxu0 0.0
    %632 = vmatprep.subr.mxu0 0.0
    %633 = vmatpush1.msra.mxu0 0.0
    %634 = vmatprep.subr.mxu0 0.0
    %635 = vmatpush1.msra.mxu0 0.0
    %636 = vmatprep.subr.mxu0 0.0
    %637 = vmatpush1.msra.mxu0 0.0
    %638 = vmatprep.subr.mxu0 0.0
    %639 = vmatpush1.msra.mxu0 0.0
    %640 = vmatprep.subr.mxu0 0.0
    %641 = vmatpush1.msra.mxu0 0.0
    %642 = vmatprep.subr.mxu0 0.0
    %643 = vmatpush1.msra.mxu0 0.0
    %644 = vmatprep.subr.mxu0 0.0
    %645 = vmatpush1.msra.mxu0 0.0
    %646 = vmatprep.subr.mxu0 0.0
    %647 = vmatpush1.msra.mxu0 0.0
    %648 = vmatprep.subr.mxu0 0.0
    %649 = vmatpush1.msra.mxu0 0.0
    %650 = vmatprep.subr.mxu0 0.0
    %651 = vmatpush1.msra.mxu0 0.0
    %652 = vmatprep.subr.mxu0 0.0
    %653 = vmatpush1.msra.mxu0 0.0
    %654 = vmatprep.mubr.f32.mxu0 0.0
    %655 = vmatmul.mubr.f32.gmra.mrb[0].mxu0 %v588
    %v656 = vpop.f32.mrb[0].mxu0
    %v657 = vadd.f32 0.0, %v656
    %v658 = vpop.f32.mrb[0].mxu0
    %659 = vdwg.mxu0
    %v660 = vadd.f32 %v587, %v657
    %v661 = vxor.u32 %v660, 2147483648
    %v662 = vmul.f32 %v661, 1.442695
    %v663 = vpow.pop %v662
    %v664 = vadd.f32 %v663, 1.0
    %v665 = vrcp.pop %v664
    %v666 = vmul.f32 1.0, %v665
    %v667 = vtanh.pop %v660
    %v668 = vmul.f32 %v666, %v573
    %670 = vrot.lane.b32.xlu0 %v667, 64
    %v671 = vpop.permute.xlu0 %670
    %v673 = vmul.f32 %v666, %v671
    %675 = vrot.lane.b32.xlu0 %v673, 32
    %v676 = vpop.permute.xlu0 %675
    %v678 = vadd.f32 %v668, %v676
    %v679 = vtanh.pop %v678
    %681 = vrot.lane.b32.xlu0 %v679, 64
    %v682 = vpop.permute.xlu0 %681
    %v684 = vmul.f32 %v666, %v682
    %686 = vrot.lane.b32.xlu0 %v684, 32
    %v687 = vpop.permute.xlu0 %686
    %s689 = scalar_lea.vmem [#allocation7], 10
    %690 = vst.msk [vmem:[%s689] sm:$0x3] %vm164, %v687
    %s691 = scalar_lea.vmem [#allocation2], 12
    %v692 = vld [vmem:[%s691] sm:$0x3]
    %v693 = vsel %vm57, %v687, 0
    %695 = vmatprep.subr.mxu0 0.0
    %696 = vmatpush1.msra.mxu0 %v50
    %697 = vmatprep.subr.mxu0 0.0
    %698 = vmatpush1.msra.mxu0 %v51
    %699 = vmatprep.subr.mxu0 0.0
    %700 = vmatpush1.msra.mxu0 %v52
    %701 = vmatprep.subr.mxu0 0.0
    %702 = vmatpush1.msra.mxu0 %v53
    %703 = vmatprep.subr.mxu0 0.0
    %704 = vmatpush1.msra.mxu0 0.0
    %705 = vmatprep.subr.mxu0 0.0
    %706 = vmatpush1.msra.mxu0 0.0
    %707 = vmatprep.subr.mxu0 0.0
    %708 = vmatpush1.msra.mxu0 0.0
    %709 = vmatprep.subr.mxu0 0.0
    %710 = vmatpush1.msra.mxu0 0.0
    %711 = vmatprep.subr.mxu0 0.0
    %712 = vmatpush1.msra.mxu0 0.0
    %713 = vmatprep.subr.mxu0 0.0
    %714 = vmatpush1.msra.mxu0 0.0
    %715 = vmatprep.subr.mxu0 0.0
    %716 = vmatpush1.msra.mxu0 0.0
    %717 = vmatprep.subr.mxu0 0.0
    %718 = vmatpush1.msra.mxu0 0.0
    %719 = vmatprep.subr.mxu0 0.0
    %720 = vmatpush1.msra.mxu0 0.0
    %721 = vmatprep.subr.mxu0 0.0
    %722 = vmatpush1.msra.mxu0 0.0
    %723 = vmatprep.subr.mxu0 0.0
    %724 = vmatpush1.msra.mxu0 0.0
    %725 = vmatprep.subr.mxu0 0.0
    %726 = vmatpush1.msra.mxu0 0.0
    %727 = vmatprep.subr.mxu0 0.0
    %728 = vmatpush1.msra.mxu0 0.0
    %729 = vmatprep.subr.mxu0 0.0
    %730 = vmatpush1.msra.mxu0 0.0
    %731 = vmatprep.subr.mxu0 0.0
    %732 = vmatpush1.msra.mxu0 0.0
    %733 = vmatprep.subr.mxu0 0.0
    %734 = vmatpush1.msra.mxu0 0.0
    %735 = vmatprep.subr.mxu0 0.0
    %736 = vmatpush1.msra.mxu0 0.0
    %737 = vmatprep.subr.mxu0 0.0
    %738 = vmatpush1.msra.mxu0 0.0
    %739 = vmatprep.subr.mxu0 0.0
    %740 = vmatpush1.msra.mxu0 0.0
    %741 = vmatprep.subr.mxu0 0.0
    %742 = vmatpush1.msra.mxu0 0.0
    %743 = vmatprep.subr.mxu0 0.0
    %744 = vmatpush1.msra.mxu0 0.0
    %745 = vmatprep.subr.mxu0 0.0
    %746 = vmatpush1.msra.mxu0 0.0
    %747 = vmatprep.subr.mxu0 0.0
    %748 = vmatpush1.msra.mxu0 0.0
    %749 = vmatprep.subr.mxu0 0.0
    %750 = vmatpush1.msra.mxu0 0.0
    %751 = vmatprep.subr.mxu0 0.0
    %752 = vmatpush1.msra.mxu0 0.0
    %753 = vmatprep.subr.mxu0 0.0
    %754 = vmatpush1.msra.mxu0 0.0
    %755 = vmatprep.subr.mxu0 0.0
    %756 = vmatpush1.msra.mxu0 0.0
    %757 = vmatprep.subr.mxu0 0.0
    %758 = vmatpush1.msra.mxu0 0.0
    %759 = vmatprep.mubr.f32.mxu0 0.0
    %760 = vmatmul.mubr.f32.gmra.mrb[0].mxu0 %v693
    %v761 = vpop.f32.mrb[0].mxu0
    %v762 = vadd.f32 0.0, %v761
    %v763 = vpop.f32.mrb[0].mxu0
    %764 = vdwg.mxu0
    %v765 = vadd.f32 %v692, %v762
    %v766 = vxor.u32 %v765, 2147483648
    %v767 = vmul.f32 %v766, 1.442695
    %v768 = vpow.pop %v767
    %v769 = vadd.f32 %v768, 1.0
    %v770 = vrcp.pop %v769
    %v771 = vmul.f32 1.0, %v770
    %v772 = vtanh.pop %v765
    %v773 = vmul.f32 %v771, %v678
    %775 = vrot.lane.b32.xlu0 %v772, 64
    %v776 = vpop.permute.xlu0 %775
    %v778 = vmul.f32 %v771, %v776
    %780 = vrot.lane.b32.xlu0 %v778, 32
    %v781 = vpop.permute.xlu0 %780
    %v783 = vadd.f32 %v773, %v781
    %v784 = vtanh.pop %v783
    %786 = vrot.lane.b32.xlu0 %v784, 64
    %v787 = vpop.permute.xlu0 %786
    %v789 = vmul.f32 %v771, %v787
    %791 = vrot.lane.b32.xlu0 %v789, 32
    %v792 = vpop.permute.xlu0 %791
    %s794 = scalar_lea.vmem [#allocation7], 12
    %795 = vst.msk [vmem:[%s794] sm:$0x3] %vm164, %v792
    %s796 = scalar_lea.vmem [#allocation2], 14
    %v797 = vld [vmem:[%s796] sm:$0x3]
    %v798 = vsel %vm57, %v792, 0
    %800 = vmatprep.subr.mxu0 0.0
    %801 = vmatpush1.msra.mxu0 %v50
    %802 = vmatprep.subr.mxu0 0.0
    %803 = vmatpush1.msra.mxu0 %v51
    %804 = vmatprep.subr.mxu0 0.0
    %805 = vmatpush1.msra.mxu0 %v52
    %806 = vmatprep.subr.mxu0 0.0
    %807 = vmatpush1.msra.mxu0 %v53
    %808 = vmatprep.subr.mxu0 0.0
    %809 = vmatpush1.msra.mxu0 0.0
    %810 = vmatprep.subr.mxu0 0.0
    %811 = vmatpush1.msra.mxu0 0.0
    %812 = vmatprep.subr.mxu0 0.0
    %813 = vmatpush1.msra.mxu0 0.0
    %814 = vmatprep.subr.mxu0 0.0
    %815 = vmatpush1.msra.mxu0 0.0
    %816 = vmatprep.subr.mxu0 0.0
    %817 = vmatpush1.msra.mxu0 0.0
    %818 = vmatprep.subr.mxu0 0.0
    %819 = vmatpush1.msra.mxu0 0.0
    %820 = vmatprep.subr.mxu0 0.0
    %821 = vmatpush1.msra.mxu0 0.0
    %822 = vmatprep.subr.mxu0 0.0
    %823 = vmatpush1.msra.mxu0 0.0
    %824 = vmatprep.subr.mxu0 0.0
    %825 = vmatpush1.msra.mxu0 0.0
    %826 = vmatprep.subr.mxu0 0.0
    %827 = vmatpush1.msra.mxu0 0.0
    %828 = vmatprep.subr.mxu0 0.0
    %829 = vmatpush1.msra.mxu0 0.0
    %830 = vmatprep.subr.mxu0 0.0
    %831 = vmatpush1.msra.mxu0 0.0
    %832 = vmatprep.subr.mxu0 0.0
    %833 = vmatpush1.msra.mxu0 0.0
    %834 = vmatprep.subr.mxu0 0.0
    %835 = vmatpush1.msra.mxu0 0.0
    %836 = vmatprep.subr.mxu0 0.0
    %837 = vmatpush1.msra.mxu0 0.0
    %838 = vmatprep.subr.mxu0 0.0
    %839 = vmatpush1.msra.mxu0 0.0
    %840 = vmatprep.subr.mxu0 0.0
    %841 = vmatpush1.msra.mxu0 0.0
    %842 = vmatprep.subr.mxu0 0.0
    %843 = vmatpush1.msra.mxu0 0.0
    %844 = vmatprep.subr.mxu0 0.0
    %845 = vmatpush1.msra.mxu0 0.0
    %846 = vmatprep.subr.mxu0 0.0
    %847 = vmatpush1.msra.mxu0 0.0
    %848 = vmatprep.subr.mxu0 0.0
    %849 = vmatpush1.msra.mxu0 0.0
    %850 = vmatprep.subr.mxu0 0.0
    %851 = vmatpush1.msra.mxu0 0.0
    %852 = vmatprep.subr.mxu0 0.0
    %853 = vmatpush1.msra.mxu0 0.0
    %854 = vmatprep.subr.mxu0 0.0
    %855 = vmatpush1.msra.mxu0 0.0
    %856 = vmatprep.subr.mxu0 0.0
    %857 = vmatpush1.msra.mxu0 0.0
    %858 = vmatprep.subr.mxu0 0.0
    %859 = vmatpush1.msra.mxu0 0.0
    %860 = vmatprep.subr.mxu0 0.0
    %861 = vmatpush1.msra.mxu0 0.0
    %862 = vmatprep.subr.mxu0 0.0
    %863 = vmatpush1.msra.mxu0 0.0
    %864 = vmatprep.mubr.f32.mxu0 0.0
    %865 = vmatmul.mubr.f32.gmra.mrb[0].mxu0 %v798
    %v866 = vpop.f32.mrb[0].mxu0
    %v867 = vadd.f32 0.0, %v866
    %v868 = vpop.f32.mrb[0].mxu0
    %869 = vdwg.mxu0
    %v870 = vadd.f32 %v797, %v867
    %v871 = vxor.u32 %v870, 2147483648
    %v872 = vmul.f32 %v871, 1.442695
    %v873 = vpow.pop %v872
    %v874 = vadd.f32 %v873, 1.0
    %v875 = vrcp.pop %v874
    %v876 = vmul.f32 1.0, %v875
    %v877 = vtanh.pop %v870
    %v878 = vmul.f32 %v876, %v783
    %880 = vrot.lane.b32.xlu0 %v877, 64
    %v881 = vpop.permute.xlu0 %880
    %v883 = vmul.f32 %v876, %v881
    %885 = vrot.lane.b32.xlu0 %v883, 32
    %v886 = vpop.permute.xlu0 %885
    %v888 = vadd.f32 %v878, %v886
    %v889 = vtanh.pop %v888
    %891 = vrot.lane.b32.xlu0 %v889, 64
    %v892 = vpop.permute.xlu0 %891
    %v894 = vmul.f32 %v876, %v892
    %896 = vrot.lane.b32.xlu0 %v894, 32
    %v897 = vpop.permute.xlu0 %896
    %s899 = scalar_lea.vmem [#allocation7], 14
    %900 = vst.msk [vmem:[%s899] sm:$0x3] %vm164, %v897
    %901 = vst.msk [vmem:[#allocation8] sm:$0x3] %vm164, %v897
    %903 = vrot.lane.b32.xlu0 %v888, 96
    %v904 = vpop.permute.xlu0 %903
    %906 = vst.msk [vmem:[#allocation10] sm:$0x3] %vm164, %v904
    // Predicated region
    $region26: #{tpu_custom_call.1} parent=1 // pred_check
      _
    $region27: #{tpu_custom_call.1} parent=1 // pred_check_branch
      %908 = sbr.rel (0) target = $region29
    $region28: #{tpu_custom_call.1} parent=1 // pred_region
      %s910 = ssub.s32 256, 256
      %911 = vsyncadd [#allocation4], %s910
      %s912 = sshll.u32 [#allocation7], 4
      %s913 = int_to_ptr.vmem [resolvable:$true] %s912
      %918 = dma.vmem_to_hbm [thread:$0]  %s913, 256, %s4, [#allocation4], 32, 32, 2
    $region29: #{tpu_custom_call.1} parent=1 // pred_fallthru
      _
    // Predicated region
    $region30: #{tpu_custom_call.1} parent=1 // pred_check
      _
    $region31: #{tpu_custom_call.1} parent=1 // pred_check_branch
      %920 = sbr.rel (0) target = $region33
    $region32: #{tpu_custom_call.1} parent=1 // pred_region
      %s922 = ssub.s32 32, 32
      %923 = vsyncadd [#allocation9], %s922
      %s925 = sshll.u32 [#allocation8], 4
      %s926 = int_to_ptr.vmem [resolvable:$true] %s925
      %928 = dma.vmem_to_hbm [thread:$0]  %s926, 32, %s5, [#allocation9]
    $region33: #{tpu_custom_call.1} parent=1 // pred_fallthru
      _
    // Predicated region
    $region34: #{tpu_custom_call.1} parent=1 // pred_check
      _
    $region35: #{tpu_custom_call.1} parent=1 // pred_check_branch
      %930 = sbr.rel (0) target = $region37
    $region36: #{tpu_custom_call.1} parent=1 // pred_region
      %s932 = ssub.s32 32, 32
      %933 = vsyncadd [#allocation9], %s932
      %s935 = sshll.u32 [#allocation10], 4
      %s936 = int_to_ptr.vmem [resolvable:$true] %s935
      %938 = dma.vmem_to_hbm [thread:$0]  %s936, 32, %s6, [#allocation9]
    $region37: #{tpu_custom_call.1} parent=1 // pred_fallthru
      _
    // Predicated region
    $region38: #{tpu_custom_call.1} parent=1 // pred_check
      _
    $region39: #{tpu_custom_call.1} parent=1 // pred_check_branch
      %940 = sbr.rel (0) target = $region41
    $region40: #{tpu_custom_call.1} parent=1 // pred_region
      %941 = dma.done [#allocation4], 256
    $region41: #{tpu_custom_call.1} parent=1 // pred_fallthru
      _
    // Predicated region
    $region42: #{tpu_custom_call.1} parent=1 // pred_check
      _
    $region43: #{tpu_custom_call.1} parent=1 // pred_check_branch
      %943 = sbr.rel (0) target = $region45
    $region44: #{tpu_custom_call.1} parent=1 // pred_region
      %944 = dma.done [#allocation9], 32
    $region45: #{tpu_custom_call.1} parent=1 // pred_fallthru
      _
    // Predicated region
    $region46: #{tpu_custom_call.1} parent=1 // pred_check
      _
    $region47: #{tpu_custom_call.1} parent=1 // pred_check_branch
      %946 = sbr.rel (0) target = $region49
    $region48: #{tpu_custom_call.1} parent=1 // pred_region
      %947 = dma.done [#allocation9], 32
    $region49: #{tpu_custom_call.1} parent=1 // pred_fallthru
      _
    %948 = vsyncpa [#allocation3], 1
    %949 = vsyncpa [#allocation6], 1
    %950 = vsyncpa [#allocation4], 1
    %951 = vsyncpa [#allocation9], 1

</llo_original>
